<compile_context>
chip_gen: v6e
topology: v6e:2x2x1
jax: 0.10.0
libtpu: 0.0.40
codegen_flags: <defaults>
</compile_context>

<pallas_src>
import functools
import math

import jax
import jax.numpy as jnp
from jax import lax
from jax.experimental import pallas as pl
from jax.experimental.pallas import tpu as pltpu

CN_EPS = 1e-5
_VMEM_LIMIT_BYTES = 48 << 20      # explicit scoped-VMEM request (safe on v5e/v6e/v7x)
_VMEM_BLOCK_BUDGET = 40 << 20     # budget used when picking block sizes


# ------------------------------- Pallas kernel -------------------------------
def _common_norm_kernel(*refs, eps, affine):
    if affine:
        ab_ref, x_ref, o_ref = refs
    else:
        x_ref, o_ref = refs

    # x block: (OT, C, TS) -- reduce dim on axis=1, lane-dense trailing dim.
    x = x_ref[...].astype(jnp.float32)
    inv_c = jnp.float32(1.0 / x.shape[1])

    # two-pass statistics (matches the torch reference numerics)
    mean = jnp.sum(x, axis=1, keepdims=True) * inv_c          # (OT, 1, TS)
    xm = x - mean
    var = jnp.sum(xm * xm, axis=1, keepdims=True) * inv_c     # (OT, 1, TS)
    rstd = lax.rsqrt(var + jnp.float32(eps))

    if affine:
        a = ab_ref[0] * rstd                                  # scalar from SMEM
        y = xm * a + ab_ref[1]
    else:
        y = xm * rstd
    o_ref[...] = y.astype(o_ref.dtype)


# ------------------------------ block selection -------------------------------
def _pick_block(outer, c, inner, itemsize):
    """Pick (outer_tile, lane_tile) so each grid step moves multiple MiB of
    HBM traffic while the VMEM footprint (2x in + 2x out double-buffered in
    the native dtype, plus ~3 f32-sized temporaries) stays inside budget."""
    per_elem = 4 * itemsize + 3 * 4            # bytes of VMEM per block element
    max_elems = max(_VMEM_BLOCK_BUDGET // per_elem, c * min(inner, 128))

    # lane tile: multiple of 128 (or the full dim when inner < 128)
    if inner <= 128:
        ts = inner
    else:
        ts = 128
        while ts * 2 <= inner and c * (ts * 2) <= max_elems:
            ts *= 2

    # fuse outer rows until the block hits the budget
    ot = 1
    while ot * 2 <= outer and (ot * 2) * c * ts <= max_elems:
        ot *= 2

    # v7x megacore: make sure both TensorCores get at least one grid step
    if pl.cdiv(outer, ot) * pl.cdiv(inner, ts) < 2:
        if outer >= 2:
            ot = (outer + 1) // 2
        elif ts > 128:
            ts = max(128, ts // 2)
    return ot, ts


# --------------------------------- wrapper -----------------------------------
def common_norm(x, alpha=1.0, beta=0.0, *, dim=1, eps=CN_EPS,
                elementwise_affine=True):
    """CommonNorm over `dim` of `x` with scalar affine alpha/beta."""
    shape = x.shape
    d = dim % x.ndim
    outer = math.prod(shape[:d]) if d > 0 else 1
    c = shape[d]
    inner = math.prod(shape[d + 1:]) if d + 1 < x.ndim else 1

    # Free reshape (no data movement): (outer, C, inner).
    # C lands on sublanes, the contiguous tail (e.g. H*W) on lanes.
    x3 = x.reshape(outer, c, inner)
    ot, ts = _pick_block(outer, c, inner, x.dtype.itemsize)
    grid = (pl.cdiv(outer, ot), pl.cdiv(inner, ts))

    tile = pl.BlockSpec((ot, c, ts), lambda i, j: (i, 0, j))
    kernel = functools.partial(_common_norm_kernel, eps=eps,
                               affine=elementwise_affine)

    in_specs = [tile]
    operands = [x3]
    if elementwise_affine:
        ab = jnp.stack([jnp.asarray(alpha, jnp.float32).reshape(()),
                        jnp.asarray(beta, jnp.float32).reshape(())])
        in_specs = [pl.BlockSpec(memory_space=pltpu.MemorySpace.SMEM)] + in_specs
        operands = [ab] + operands

    out = pl.pallas_call(
        kernel,
        out_shape=jax.ShapeDtypeStruct((outer, c, inner), x.dtype),
        grid=grid,
        in_specs=in_specs,
        out_specs=tile,
        compiler_params=pltpu.CompilerParams(
            dimension_semantics=("parallel", "parallel"),
            vmem_limit_bytes=_VMEM_LIMIT_BYTES),
    )(*operands)

    return out.reshape(shape)


# ------------------------- pure-JAX reference (torch) -------------------------
def common_norm_reference(x, alpha, beta, *, dim=1, eps=CN_EPS,
                          elementwise_affine=True):
    mean = jnp.mean(x, axis=dim, keepdims=True)
    var = jnp.mean((x - mean) ** 2, axis=dim, keepdims=True)
    norm = (x - mean) / jnp.sqrt(var + eps)
    if elementwise_affine:
        return alpha * norm + beta
    return norm


# ----------------------------------- main ------------------------------------
if __name__ == "__main__":
    key = jax.random.PRNGKey(0)
    kx, ka, kb = jax.random.split(key, 3)

    # CommonNorm(dim=1) over an NCHW feature map, as used in net_point.py
    N, C, H, W = 2, 4, 16, 16
    x = jax.random.normal(kx, (N, C, H, W), jnp.float32)
    alpha = 1.0 + 0.1 * jax.random.normal(ka, (), jnp.float32)
    beta = 0.1 * jax.random.normal(kb, (), jnp.float32)

    out = jax.block_until_ready(common_norm(x, alpha, beta, dim=1))
    ref = jax.block_until_ready(common_norm_reference(x, alpha, beta, dim=1))
    assert out.shape == ref.shape
    assert bool(jnp.allclose(out, ref, atol=1e-4, rtol=1e-4)), (
        f"max abs err {float(jnp.max(jnp.abs(out - ref)))}")

    # non-affine path (elementwise_affine=False)
    out2 = jax.block_until_ready(
        common_norm(x, dim=1, elementwise_affine=False))
    ref2 = common_norm_reference(x, 1.0, 0.0, dim=1, elementwise_affine=False)
    assert bool(jnp.allclose(out2, ref2, atol=1e-4, rtol=1e-4))

    # a second reduce axis to exercise outer-row fusion / ragged lane tiles
    x3 = jax.random.normal(kx, (2, 8, 96), jnp.float32)
    out3 = jax.block_until_ready(common_norm(x3, alpha, beta, dim=1))
    ref3 = common_norm_reference(x3, alpha, beta, dim=1)
    assert bool(jnp.allclose(out3, ref3, atol=1e-4, rtol=1e-4))

    print("KERNEL_OK")
</pallas_src>

<mosaic_0001>
module attributes {stable_mosaic.version = 11 : i64} {
  func.func @_common_norm_kernel(%arg0: i32, %arg1: i32, %arg2: memref<2xf32, #tpu.memory_space<smem>>, %arg3: memref<1x4x256xf32, #tpu.memory_space<vmem>>, %arg4: memref<1x4x256xf32, #tpu.memory_space<vmem>>) attributes {dimension_semantics = [#tpu.dimension_semantics<parallel>, #tpu.dimension_semantics<parallel>], iteration_bounds = array<i64: 2, 1>, scalar_prefetch = 0 : i64, scratch_operands = 0 : i64, tpu.core_type = #tpu.core_type<tc>, window_params = [{transform_indices = @transform_0, window_bounds = array<i64: 2>}, {transform_indices = @transform_1, window_bounds = array<i64: 1, 4, 256>}, {transform_indices = @transform_2, window_bounds = array<i64: 1, 4, 256>}]} {
    %c0 = arith.constant 0 : index
    %c0_0 = arith.constant 0 : index
    %c0_1 = arith.constant 0 : index
    %0 = vector.load %arg3[%c0, %c0_0, %c0_1] : memref<1x4x256xf32, #tpu.memory_space<vmem>>, vector<1x4x256xf32>
    %cst = arith.constant dense<0.000000e+00> : vector<1x256xf32>
    %1 = vector.multi_reduction <add>, %0, %cst [1] : vector<1x4x256xf32> to vector<1x256xf32>
    %2 = vector.shape_cast %1 : vector<1x256xf32> to vector<1x1x256xf32>
    %cst_2 = arith.constant 2.500000e-01 : f32
    %3 = vector.broadcast %cst_2 : f32 to vector<1x1x256xf32>
    %4 = arith.mulf %2, %3 : vector<1x1x256xf32>
    %5 = vector.broadcast %4 : vector<1x1x256xf32> to vector<1x4x256xf32>
    %6 = arith.subf %0, %5 : vector<1x4x256xf32>
    %7 = arith.mulf %6, %6 : vector<1x4x256xf32>
    %cst_3 = arith.constant dense<0.000000e+00> : vector<1x256xf32>
    %8 = vector.multi_reduction <add>, %7, %cst_3 [1] : vector<1x4x256xf32> to vector<1x256xf32>
    %9 = vector.shape_cast %8 : vector<1x256xf32> to vector<1x1x256xf32>
    %cst_4 = arith.constant 2.500000e-01 : f32
    %10 = vector.broadcast %cst_4 : f32 to vector<1x1x256xf32>
    %11 = arith.mulf %9, %10 : vector<1x1x256xf32>
    %cst_5 = arith.constant 9.99999974E-6 : f32
    %12 = vector.broadcast %cst_5 : f32 to vector<1x1x256xf32>
    %13 = arith.addf %11, %12 : vector<1x1x256xf32>
    %14 = math.rsqrt %13 : vector<1x1x256xf32>
    %c0_6 = arith.constant 0 : index
    %15 = memref.load %arg2[%c0_6] : memref<2xf32, #tpu.memory_space<smem>>
    %16 = vector.broadcast %15 : f32 to vector<1x1x256xf32>
    %17 = arith.mulf %16, %14 : vector<1x1x256xf32>
    %18 = vector.broadcast %17 : vector<1x1x256xf32> to vector<1x4x256xf32>
    %19 = arith.mulf %6, %18 : vector<1x4x256xf32>
    %c1 = arith.constant 1 : index
    %20 = memref.load %arg2[%c1] : memref<2xf32, #tpu.memory_space<smem>>
    %21 = vector.broadcast %20 : f32 to vector<1x4x256xf32>
    %22 = arith.addf %19, %21 : vector<1x4x256xf32>
    %c0_7 = arith.constant 0 : index
    %c0_8 = arith.constant 0 : index
    %c0_9 = arith.constant 0 : index
    %23 = vector.load %arg4[%c0_7, %c0_8, %c0_9] : memref<1x4x256xf32, #tpu.memory_space<vmem>>, vector<1x4x256xf32>
    tpu.vector_store %arg4[%c0_7, %c0_8, %c0_9], %22 {strides = array<i32>} : memref<1x4x256xf32, #tpu.memory_space<vmem>>, vector<1x4x256xf32>,
    return
  }
  func.func @transform_0(%arg0: i32, %arg1: i32) -> i32 {
    %c0_i32 = arith.constant 0 : i32
    %c0_i32_0 = arith.constant 0 : i32
    return %c0_i32 : i32
  }
  func.func @transform_1(%arg0: i32, %arg1: i32) -> (i32, i32, i32) {
    %c0_i32 = arith.constant 0 : i32
    %c0_i32_0 = arith.constant 0 : i32
    return %arg0, %c0_i32, %arg1 : i32, i32, i32
  }
  func.func @transform_2(%arg0: i32, %arg1: i32) -> (i32, i32, i32) {
    %c0_i32 = arith.constant 0 : i32
    %c0_i32_0 = arith.constant 0 : i32
    return %arg0, %c0_i32, %arg1 : i32, i32, i32
  }
}

</mosaic_0001>

<llo_original>
// kernel: tpu_custom_call.1
$region0: #{tpu_custom_call.1}
  #allocation0 [shape = 'u32[]', space=smem, size = 0x4, offset = 0x4, fixed_abs, tag = 'smem constant byte address 0x4 - core index']
  #allocation1 [shape = 'u32[144,128]{1,0:T(1,128)}', space=vmem, size = 0x12000, scoped, tag = 'internal scratch']
  %s0 = inlined_call_operand.hbm [shape: f32[2], index: 0, kind: input, shape index: {}]
  %s1 = inlined_call_operand.hbm [shape: f32[2,4,256], index: 1, kind: input, shape index: {}]
  %s2 = inlined_call_operand.hbm [shape: f32[2,4,256], index: 2, kind: output, shape index: {}]
  %s3 = sld [smem:[#allocation0]]
  $region49: #{tpu_custom_call.1} parent=0
    _
  %s5 = ssub.s32 1, %s3
  %s6 = scalar_select 0, %s5, %s3
  $region1: #{tpu_custom_call.1} parent=0
    #allocation2 [shape = 'u8[512]{0}', space=smem, size = 0x200, scoped, tag = 'input window, operand 0, single buffered']
    #allocation3 [shape = 's32[2]{0}', space=sflag, size = 0x8, scoped, tag = 'scoped memory for tpu_custom_call.1']
    #allocation4 [shape = 's32[2]{0}', space=sflag, size = 0x8, scoped, tag = 'scoped memory for tpu_custom_call.1']
    #allocation5 [shape = 's32[2]{0}', space=sflag, size = 0x8, scoped, tag = 'scoped memory for tpu_custom_call.1']
    #allocation6 [shape = 'u8[8192]{0}', space=vmem, size = 0x2000, scoped, tag = 'input window, operand 1']
    #allocation7 [shape = 'u8[8192]{0}', space=vmem, size = 0x2000, scoped, tag = 'output window, operand 0']
    %7 = vsyncpa [#allocation5], 0
    %8 = vsyncpa [#allocation3], 0
    %s9 = scalar_lea.sflag [#allocation3], 1
    %10 = vsyncpa %s9, 0
    %11 = vsyncpa [#allocation4], 0
    %s12 = scalar_lea.sflag [#allocation4], 1
    %13 = vsyncpa %s12, 0
    loop: start=0, step=1, limit=4
    $region2: #{tpu_custom_call.1} parent=1 // loop_pre_header
      _
    $region3: #{tpu_custom_call.1} parent=1 // loop_header
      %s15 = sphi 0, %s19
      %p16 = scmp.ge.s32.totalorder %s15, 4
      %s22 = sphi 0, %s34
      %s23 = sphi 0, %s30
      %s24 = sphi 0, %s22
      %s25 = sphi 0, %s23
      %s26 = sphi 0, %s24
      %s27 = sphi 0, %s25
      %s35 = sphi 0, %s35
      %s37 = sphi 0, %s35
      %s38 = sphi 0, %s37
      %s52 = sphi 0, %s38
      %s60 = sphi 0, %s62
      %s63 = sphi 0, %s60
      %s64 = sphi 0, %s63
      %s80 = sphi 0, %s64
      %s88 = sphi 0, %s90
      %s91 = sphi 0, %s88
      %s92 = sphi 0, %s91
      %s108 = sphi 0, %s92
    $region4: #{tpu_custom_call.1} parent=1 // loop_header_branch
      %18 = sbr.rel (%p16) target = $region8
    $region5: #{tpu_custom_call.1} parent=1 // loop_body
      %s20 = ssub.s32 %s15, 1
      %s21 = ssub.s32 %s15, 2
      %s28 = sadd.s32 1, %s23
      %p29 = scmp.ge.s32.totalorder %s28, 1
      %s30 = scalar_select %p29, 0, %s28
      %s31 = sadd.s32 1, %s22
      %s32 = scalar_select %p29, %s31, %s22
      %p33 = scmp.ge.s32.totalorder %s32, 2
      %s34 = scalar_select %p33, 0, %s32
      %s36 = sadd.s32 %s35, 1
      %p39 = scmp.eq.s32.totalorder %s15, 1
      %p40 = scmp.ne.s32.totalorder %s35, %s37
      %p41 = scmp.eq.s32.totalorder %s15, 0
      %p42 = por %p40, %p41
      %p43 = scmp.ne.s32.totalorder %s35, %s37
      %p44 = scmp.eq.s32.totalorder %s20, 1
      %p45 = por %p43, %p44
      %p46 = scmp.ne.s32.totalorder %s37, %s38
      %p47 = scmp.eq.s32.totalorder %s20, 0
      %p48 = por %p46, %p47
      %p49 = scmp.ne.s32.totalorder %s37, %s38
      %p50 = scmp.eq.s32.totalorder %s21, 1
      %p51 = por %p49, %p50
      %p53 = scmp.ne.s32.totalorder %s38, %s52
      %p54 = scmp.eq.s32.totalorder %s21, 0
      %p55 = por %p53, %p54
      %s56 = ssub.s32 %s22, %s34
      %s57 = ssub.s32 %s23, %s30
      %s58 = sor.u32 %s56, %s57
      %p59 = scmp.eq.s32.totalorder %s58, 0
      %s61 = sadd.s32 %s60, 1
      %s62 = scalar_select %p59, %s60, %s61
      %p65 = pneg %p59
      %p66 = scmp.eq.s32.totalorder %s15, 1
      %p67 = por %p65, %p66
      %p68 = scmp.ne.s32.totalorder %s60, %s63
      %p69 = scmp.eq.s32.totalorder %s15, 0
      %p70 = por %p68, %p69
      %p71 = scmp.ne.s32.totalorder %s60, %s63
      %p72 = scmp.eq.s32.totalorder %s20, 1
      %p73 = por %p71, %p72
      %p74 = scmp.ne.s32.totalorder %s63, %s64
      %p75 = scmp.eq.s32.totalorder %s20, 0
      %p76 = por %p74, %p75
      %p77 = scmp.ne.s32.totalorder %s63, %s64
      %p78 = scmp.eq.s32.totalorder %s21, 1
      %p79 = por %p77, %p78
      %p81 = scmp.ne.s32.totalorder %s64, %s80
      %p82 = scmp.eq.s32.totalorder %s21, 0
      %p83 = por %p81, %p82
      %s84 = ssub.s32 %s22, %s34
      %s85 = ssub.s32 %s23, %s30
      %s86 = sor.u32 %s84, %s85
      %p87 = scmp.eq.s32.totalorder %s86, 0
      %s89 = sadd.s32 %s88, 1
      %s90 = scalar_select %p87, %s88, %s89
      %p93 = pneg %p87
      %p94 = scmp.eq.s32.totalorder %s15, 1
      %p95 = por %p93, %p94
      %p96 = scmp.ne.s32.totalorder %s88, %s91
      %p97 = scmp.eq.s32.totalorder %s15, 0
      %p98 = por %p96, %p97
      %p99 = scmp.ne.s32.totalorder %s88, %s91
      %p100 = scmp.eq.s32.totalorder %s20, 1
      %p101 = por %p99, %p100
      %p102 = scmp.ne.s32.totalorder %s91, %s92
      %p103 = scmp.eq.s32.totalorder %s20, 0
      %p104 = por %p102, %p103
      %p105 = scmp.ne.s32.totalorder %s91, %s92
      %p106 = scmp.eq.s32.totalorder %s21, 1
      %p107 = por %p105, %p106
      %p109 = scmp.ne.s32.totalorder %s92, %s108
      %p110 = scmp.eq.s32.totalorder %s21, 0
      %p111 = por %p109, %p110
      %p112 = scmp.le.s32.totalorder 1, %s15
      %p113 = scmp.lt.s32.totalorder %s15, 3
      %p114 = pnand %p112, %p113
      %p115 = pneg %p114
      // Predicated region
      $region9: #{tpu_custom_call.1} parent=5 // pred_check
        _
      $region10: #{tpu_custom_call.1} parent=5 // pred_check_branch
        %117 = sbr.rel (%p114) target = $region12
      $region11: #{tpu_custom_call.1} parent=5 // pred_region
        %s118 = ssub.s32 %s15, 1
        // Predicated region
        $region13: #{tpu_custom_call.1} parent=11 // pred_check
          %p119 = pneg %p48
        $region14: #{tpu_custom_call.1} parent=11 // pred_check_branch
          %121 = sbr.rel (%p119) target = $region16
        $region15: #{tpu_custom_call.1} parent=11 // pred_region
          %s123 = ssub.s32 16, 16
          %124 = vsyncadd [#allocation5], %s123
          %127 = dma.hbm_to_smem %s0, 16, [#allocation2], [#allocation5]
        $region16: #{tpu_custom_call.1} parent=11 // pred_fallthru
          _
      $region12: #{tpu_custom_call.1} parent=5 // pred_fallthru
        _
      %p128 = scmp.lt.s32.totalorder %s15, 2
      // Predicated region
      $region17: #{tpu_custom_call.1} parent=5 // pred_check
        %p129 = pneg %p128
      $region18: #{tpu_custom_call.1} parent=5 // pred_check_branch
        %131 = sbr.rel (%p129) target = $region20
      $region19: #{tpu_custom_call.1} parent=5 // pred_region
        // Predicated region
        $region21: #{tpu_custom_call.1} parent=19 // pred_check
          %p132 = pneg %p70
        $region22: #{tpu_custom_call.1} parent=19 // pred_check_branch
          %134 = sbr.rel (%p132) target = $region24
        $region23: #{tpu_custom_call.1} parent=19 // pred_region
          %s135 = sand.u32 %s60, 1
          %s136 = scalar_lea.sflag [#allocation3], %s135
          %s137 = sand.u32 %s60, 1
          %s138 = smul.addr %s137, 8
          %s139 = scalar_lea.vmem [#allocation6], %s138
          %s140 = smul.u32 2, %s23
          %s142 = ssub.s32 128, 128
          %143 = vsyncadd %s136, %s142
          %s144 = smul.addr %s22, 2
          %s145 = sadd.s32 %s140, %s144
          %s146 = smul.addr %s145, 64
          %s147 = scalar_lea.hbm %s1, %s146
          %s149 = sshll.u32 %s139, 4
          %s150 = int_to_ptr.vmem [resolvable:$true] %s149
          %152 = dma.hbm_to_vmem [thread:$0]  %s147, 128, %s150, %s136
        $region24: #{tpu_custom_call.1} parent=19 // pred_fallthru
          _
      $region20: #{tpu_custom_call.1} parent=5 // pred_fallthru
        _
      %p153 = scmp.le.s32.totalorder 1, %s15
      %p154 = scmp.lt.s32.totalorder %s15, 3
      %p155 = pnand %p153, %p154
      %p156 = pneg %p155
      // Predicated region
      $region25: #{tpu_custom_call.1} parent=5 // pred_check
        _
      $region26: #{tpu_custom_call.1} parent=5 // pred_check_branch
        %158 = sbr.rel (%p155) target = $region28
      $region27: #{tpu_custom_call.1} parent=5 // pred_region
        %s159 = ssub.s32 %s15, 1
        // Predicated region
        $region29: #{tpu_custom_call.1} parent=27 // pred_check
          %p160 = pneg %p48
        $region30: #{tpu_custom_call.1} parent=27 // pred_check_branch
          %162 = sbr.rel (%p160) target = $region32
        $region31: #{tpu_custom_call.1} parent=27 // pred_region
          %163 = dma.done [#allocation5], 16
        $region32: #{tpu_custom_call.1} parent=27 // pred_fallthru
          _
        %s164 = sand.u32 %s63, 1
        %s165 = scalar_lea.sflag [#allocation3], %s164
        %s166 = sand.u32 %s63, 1
        %s167 = smul.addr %s166, 8
        %s168 = scalar_lea.vmem [#allocation6], %s167
        // Predicated region
        $region33: #{tpu_custom_call.1} parent=27 // pred_check
          %p169 = pneg %p76
        $region34: #{tpu_custom_call.1} parent=27 // pred_check_branch
          %171 = sbr.rel (%p169) target = $region36
        $region35: #{tpu_custom_call.1} parent=27 // pred_region
          %172 = dma.done %s165, 128
        $region36: #{tpu_custom_call.1} parent=27 // pred_fallthru
          _
        %173 = sfence
        %p174 = pneg %p48
        %p175 = pneg %p45
        %s176 = sand.u32 %s63, 1
        %s177 = scalar_lea.sflag [#allocation3], %s176
        %s178 = sand.u32 %s63, 1
        %s179 = smul.addr %s178, 8
        %s180 = scalar_lea.vmem [#allocation6], %s179
        %p181 = pneg %p76
        %p182 = pneg %p73
        %p183 = pneg %p104
        %p184 = pneg %p101
        %s185 = sand.u32 %s91, 1
        %s186 = scalar_lea.sflag [#allocation4], %s185
        %s187 = sand.u32 %s91, 1
        %s188 = smul.addr %s187, 8
        %s189 = scalar_lea.vmem [#allocation7], %s188
        %s190 = smul.u32 2, %s25
        %s191 = smul.u32 2, %s25
        %v192 = vld [vmem:[%s168] sm:$0xff]
        %v194 = vcombine.high %v192, %v192
        %vm196 = vcmask 1043456
        %v197 = vsel %vm196, %v192, 0.0
        %v198 = vrot.slane %v197, 4
        %v199 = vadd.f32 %v197, %v198
        %v200 = vrot.slane %v199, 2
        %v201 = vadd.f32 %v199, %v200
        %v202 = vrot.slane %v201, 1
        %v203 = vadd.f32 %v201, %v202
        %v204 = vsel %vm196, %v194, 0.0
        %v205 = vrot.slane %v204, 4
        %v206 = vadd.f32 %v204, %v205
        %v207 = vrot.slane %v206, 2
        %v208 = vadd.f32 %v206, %v207
        %v209 = vrot.slane %v208, 1
        %v210 = vadd.f32 %v208, %v209
        %v211 = vmul.f32 %v203, 0.25
        %v212 = vmul.f32 %v210, 0.25
        %v215 = vcombine.low %v211, %v212
        %v217 = vsub.f32 %v192, %v215
        %v218 = vmul.f32 %v217, %v217
        %v220 = vcombine.high %v218, %v218
        %v222 = vsel %vm196, %v218, 0.0
        %v223 = vrot.slane %v222, 4
        %v224 = vadd.f32 %v222, %v223
        %v225 = vrot.slane %v224, 2
        %v226 = vadd.f32 %v224, %v225
        %v227 = vrot.slane %v226, 1
        %v228 = vadd.f32 %v226, %v227
        %v229 = vsel %vm196, %v220, 0.0
        %v230 = vrot.slane %v229, 4
        %v231 = vadd.f32 %v229, %v230
        %v232 = vrot.slane %v231, 2
        %v233 = vadd.f32 %v231, %v232
        %v234 = vrot.slane %v233, 1
        %v235 = vadd.f32 %v233, %v234
        %v236 = vmul.f32 %v228, 0.25
        %v237 = vmul.f32 %v235, 0.25
        %v238 = vadd.f32 %v236, 1e-05
        %v239 = vadd.f32 %v237, 1e-05
        %v240 = vrsqrt.pop %v238
        %v241 = vrsqrt.pop %v239
        %s242 = sld [smem:[#allocation2]]
        %v243 = vstv %s242
        %v244 = vmul.f32 %v243, %v240
        %v245 = vmul.f32 %v243, %v241
        %v248 = vcombine.low %v244, %v245
        %v250 = vmul.f32 %v217, %v248
        %s251 = sld [smem:[#allocation2 + $0x1]]
        %v252 = vstv %s251
        %v253 = vadd.f32 %v250, %v252
        %254 = vst [vmem:[%s189] sm:$0xff] %v253
        %s255 = sand.u32 %s91, 1
        %s256 = scalar_lea.sflag [#allocation4], %s255
        %s257 = sand.u32 %s91, 1
        %s258 = smul.addr %s257, 8
        %s259 = scalar_lea.vmem [#allocation7], %s258
        // Predicated region
        $region37: #{tpu_custom_call.1} parent=27 // pred_check
          %p260 = pneg %p101
        $region38: #{tpu_custom_call.1} parent=27 // pred_check_branch
          %262 = sbr.rel (%p260) target = $region40
        $region39: #{tpu_custom_call.1} parent=27 // pred_region
          %s263 = smul.u32 2, %s25
          %s265 = ssub.s32 128, 128
          %266 = vsyncadd %s256, %s265
          %s267 = smul.addr %s24, 2
          %s268 = sadd.s32 %s263, %s267
          %s269 = smul.addr %s268, 64
          %s270 = scalar_lea.hbm %s2, %s269
          %s272 = sshll.u32 %s259, 4
          %s273 = int_to_ptr.vmem [resolvable:$true] %s272
          %275 = dma.vmem_to_hbm [thread:$0]  %s273, 128, %s270, %s256
        $region40: #{tpu_custom_call.1} parent=27 // pred_fallthru
          _
      $region28: #{tpu_custom_call.1} parent=5 // pred_fallthru
        _
      %p276 = scmp.le.s32.totalorder 2, %s15
      // Predicated region
      $region41: #{tpu_custom_call.1} parent=5 // pred_check
        %p277 = pneg %p276
      $region42: #{tpu_custom_call.1} parent=5 // pred_check_branch
        %279 = sbr.rel (%p277) target = $region44
      $region43: #{tpu_custom_call.1} parent=5 // pred_region
        %s280 = ssub.s32 %s15, 2
        // Predicated region
        $region45: #{tpu_custom_call.1} parent=43 // pred_check
          %p281 = pneg %p107
        $region46: #{tpu_custom_call.1} parent=43 // pred_check_branch
          %283 = sbr.rel (%p281) target = $region48
        $region47: #{tpu_custom_call.1} parent=43 // pred_region
          %s284 = sand.u32 %s92, 1
          %s285 = scalar_lea.sflag [#allocation4], %s284
          %s286 = sand.u32 %s92, 1
          %s287 = smul.addr %s286, 8
          %s288 = scalar_lea.vmem [#allocation7], %s287
          %289 = dma.done %s285, 128
        $region48: #{tpu_custom_call.1} parent=43 // pred_fallthru
          _
      $region44: #{tpu_custom_call.1} parent=5 // pred_fallthru
        _
    $region6: #{tpu_custom_call.1} parent=1 // loop_footer
      %s19 = sadd.s32 1, %s15
    $region7: #{tpu_custom_call.1} parent=1 // loop_footer_branch
      %14 = sbr.rel target = $region3
    $region8: #{tpu_custom_call.1} parent=1 // loop_exit
      _
    %290 = vsyncpa [#allocation3], 1
    %s291 = scalar_lea.sflag [#allocation3], 1
    %292 = vsyncpa %s291, 1
    %293 = vsyncpa [#allocation4], 1
    %s294 = scalar_lea.sflag [#allocation4], 1
    %295 = vsyncpa %s294, 1
    %296 = vsyncpa [#allocation5], 1
    %s297 = scalar_lea.sflag [#allocation5], 1
    %298 = vsyncpa %s297, 1

</llo_original>
